<compile_context>
chip_gen: v7x
topology: tpu7x:2x2x1
jax: 0.10.0
libtpu: 0.0.40
codegen_flags: <defaults>
</compile_context>

<pallas_src>
import functools

import jax
import jax.numpy as jnp
from jax.experimental import pallas as pl
from jax.experimental.pallas import tpu as pltpu


def _seesaw_kernel(logits_ref, targets_ref, counts_p_ref, inv_counts_p_ref,
                   loss_ref, *, q, eps, true_b):
    i = pl.program_id(0)

    logits = logits_ref[...].astype(jnp.float32)   # [TB, C] f32
    targets = targets_ref[...]                     # [TB, 1] i32
    counts_p = counts_p_ref[...]                   # [1, C]  f32  (counts ** p)
    inv_counts_p = inv_counts_p_ref[...]           # [1, C]  f32  ((counts+eps) ** -p)

    tb, c = logits.shape

    # one-hot class mask (F.one_hot(targets).bool())
    col = jax.lax.broadcasted_iota(jnp.int32, (tb, c), 1)
    class_mask = col == targets                    # [TB, C] bool

    # softmax over classes; probs reuse exp(shifted) (no second exp pass)
    m = jnp.max(logits, axis=1, keepdims=True)
    shifted = logits - m
    e = jnp.exp(shifted)                           # [TB, C]  (EUP pass 1)
    sum_e = jnp.sum(e, axis=1, keepdims=True)
    probs = e / sum_e                              # [TB, C]

    # gather target logit / target class count^p via masked row-reductions
    target_logits = jnp.sum(jnp.where(class_mask, logits, 0.0),
                            axis=1, keepdims=True)             # [TB, 1]
    count_i_p = jnp.sum(jnp.where(class_mask, counts_p, 0.0),
                        axis=1, keepdims=True)                  # [TB, 1]

    # mitigation: (n_i / n_j)^p = n_i^p * (n_j+eps)^-p, clamped to 1
    mitigation = jnp.minimum(count_i_p * inv_counts_p, 1.0)     # [TB, C]

    # compensation: probs^q where logit_j > logit_target, else 1
    if float(q) == 2.0:
        pq = probs * probs
    elif float(q) == float(int(q)) and 1 <= int(q) <= 4:
        pq = probs
        for _ in range(int(q) - 1):
            pq = pq * probs
    else:
        pq = probs ** q
    compensation = jnp.where(logits > target_logits, pq, 1.0)   # [TB, C]

    # seesaw weights; the target class is forced to 1 (single mask application)
    weights = jnp.where(class_mask, 1.0, mitigation * compensation)
    adjusted = logits - jnp.log(weights + eps)                  # (EUP pass 2)

    # cross entropy on adjusted logits
    m2 = jnp.max(adjusted, axis=1, keepdims=True)
    sh2 = adjusted - m2
    lse2 = jnp.log(jnp.sum(jnp.exp(sh2), axis=1, keepdims=True))  # (EUP pass 3)
    target_logp = jnp.sum(jnp.where(class_mask, sh2, 0.0),
                          axis=1, keepdims=True) - lse2           # [TB, 1]
    per_sample = -target_logp                                     # [TB, 1]

    # zero out padded batch rows so the wrapper mean stays exact
    row = jax.lax.broadcasted_iota(jnp.int32, (tb, 1), 0) + i * tb
    loss_ref[...] = jnp.where(row < true_b, per_sample, 0.0)


def _pick_tile_b(batch, num_classes):
    """Batch tile: ~1 MiB f32 logits tile, multiple of 8, <= padded batch."""
    budget_rows = (1 << 20) // (4 * max(num_classes, 1))
    tb = max(8, min(512, budget_rows))
    tb = (tb // 8) * 8
    b_ceil8 = ((batch + 7) // 8) * 8
    return max(8, min(tb, b_ceil8))


def seesaw_loss(logits, targets, *, num_classes, p=0.8, q=2.0, eps=1e-12):
    """Pallas implementation of SeesawLoss.forward (reduction='mean')."""
    b, c = logits.shape
    assert c == num_classes

    # class_counts buffer starts at ones and is updated with bincount(targets)
    # *before* the loss is computed (first forward call semantics).
    counts = jnp.ones((num_classes,), jnp.float32).at[targets].add(1.0)
    counts_p = (counts ** p).reshape(1, c)                   # [1, C]
    inv_counts_p = ((counts + eps) ** (-p)).reshape(1, c)    # [1, C]

    tb = _pick_tile_b(b, c)
    num_tiles = pl.cdiv(b, tb)
    b_pad = num_tiles * tb

    targets_i = targets.astype(jnp.int32)
    if b_pad != b:
        logits = jnp.pad(logits, ((0, b_pad - b), (0, 0)))
        targets_i = jnp.pad(targets_i, (0, b_pad - b))
    targets_i = targets_i.reshape(b_pad, 1)

    kernel = functools.partial(_seesaw_kernel, q=float(q), eps=float(eps),
                               true_b=b)

    per_sample = pl.pallas_call(
        kernel,
        out_shape=jax.ShapeDtypeStruct((b_pad, 1), jnp.float32),
        grid_spec=pltpu.PrefetchScalarGridSpec(
            num_scalar_prefetch=0,
            grid=(num_tiles,),
            in_specs=[
                pl.BlockSpec((tb, c), lambda i: (i, 0)),   # logits tile
                pl.BlockSpec((tb, 1), lambda i: (i, 0)),   # targets tile
                pl.BlockSpec((1, c), lambda i: (0, 0)),    # counts**p
                pl.BlockSpec((1, c), lambda i: (0, 0)),    # (counts+eps)**-p
            ],
            out_specs=pl.BlockSpec((tb, 1), lambda i: (i, 0)),
        ),
        compiler_params=pltpu.CompilerParams(
            dimension_semantics=("parallel",)),
    )(logits, targets_i, counts_p, inv_counts_p)

    # final mean over the true batch (padded rows were zeroed in-kernel)
    return jnp.sum(per_sample) / b


def _reference_seesaw_loss(logits, targets, *, num_classes, p=0.8, q=2.0, eps=1e-12):
    """Pure-JAX reference mirroring the PyTorch module, for verification."""
    counts = jnp.ones((num_classes,), jnp.float32).at[targets].add(1.0)
    log_probs = jax.nn.log_softmax(logits, axis=1)
    probs = jnp.exp(log_probs)
    class_mask = jax.nn.one_hot(targets, num_classes, dtype=jnp.bool_)
    target_logits = jnp.take_along_axis(logits, targets[:, None], axis=1)
    count_i = counts[targets][:, None]
    mitigation = jnp.minimum((count_i / (counts[None, :] + eps)) ** p, 1.0)
    mitigation = jnp.where(class_mask, 1.0, mitigation)
    compensation = jnp.where(logits > target_logits, probs ** q, 1.0)
    weights = jnp.where(class_mask, 1.0, mitigation * compensation)
    adjusted = logits - jnp.log(weights + eps)
    logp = jax.nn.log_softmax(adjusted, axis=1)
    nll = -jnp.take_along_axis(logp, targets[:, None], axis=1)[:, 0]
    return jnp.mean(nll)


if __name__ == "__main__":
    B, C = 8, 16
    key = jax.random.PRNGKey(0)
    k1, k2 = jax.random.split(key)
    logits = jax.random.normal(k1, (B, C), dtype=jnp.float32)
    targets = jax.random.randint(k2, (B,), 0, C, dtype=jnp.int32)

    loss = seesaw_loss(logits, targets, num_classes=C)
    jax.block_until_ready(loss)

    ref = _reference_seesaw_loss(logits, targets, num_classes=C)
    assert jnp.allclose(loss, ref, rtol=2e-5, atol=2e-5), (loss, ref)

    print("KERNEL_OK")
</pallas_src>

<mosaic_0001>
module attributes {stable_mosaic.version = 11 : i64} {
  func.func @_seesaw_kernel(%arg0: i32, %arg1: memref<8x16xf32, #tpu.memory_space<vmem>>, %arg2: memref<8x1xi32, #tpu.memory_space<vmem>>, %arg3: memref<1x16xf32, #tpu.memory_space<vmem>>, %arg4: memref<1x16xf32, #tpu.memory_space<vmem>>, %arg5: memref<8x1xf32, #tpu.memory_space<vmem>>) attributes {dimension_semantics = [#tpu.dimension_semantics<parallel>], iteration_bounds = array<i64: 1>, scalar_prefetch = 0 : i64, scratch_operands = 0 : i64, tpu.core_type = #tpu.core_type<tc>, window_params = [{transform_indices = @transform_0, window_bounds = array<i64: 8, 16>}, {transform_indices = @transform_1, window_bounds = array<i64: 8, 1>}, {pipeline_mode = #tpu.pipeline_mode<synchronous>, transform_indices = @transform_2, window_bounds = array<i64: 1, 16>}, {pipeline_mode = #tpu.pipeline_mode<synchronous>, transform_indices = @transform_3, window_bounds = array<i64: 1, 16>}, {transform_indices = @transform_4, window_bounds = array<i64: 8, 1>}]} {
    %c0 = arith.constant 0 : index
    %c0_0 = arith.constant 0 : index
    %0 = vector.load %arg1[%c0, %c0_0] : memref<8x16xf32, #tpu.memory_space<vmem>>, vector<8x16xf32>
    %c0_1 = arith.constant 0 : index
    %c0_2 = arith.constant 0 : index
    %1 = vector.load %arg2[%c0_1, %c0_2] : memref<8x1xi32, #tpu.memory_space<vmem>>, vector<8x1xi32>
    %c0_3 = arith.constant 0 : index
    %c0_4 = arith.constant 0 : index
    %2 = vector.load %arg3[%c0_3, %c0_4] : memref<1x16xf32, #tpu.memory_space<vmem>>, vector<1x16xf32>
    %c0_5 = arith.constant 0 : index
    %c0_6 = arith.constant 0 : index
    %3 = vector.load %arg4[%c0_5, %c0_6] : memref<1x16xf32, #tpu.memory_space<vmem>>, vector<1x16xf32>
    %4 = tpu.iota {dimensions = array<i32: 1>} : vector<8x16xi32>
    %5 = vector.broadcast %1 : vector<8x1xi32> to vector<8x16xi32>
    %6 = arith.cmpi eq, %4, %5 : vector<8x16xi32>
    %cst = arith.constant dense<0xFF800000> : vector<8xf32>
    %7 = vector.multi_reduction <maximumf>, %0, %cst [1] : vector<8x16xf32> to vector<8xf32>
    %8 = vector.shape_cast %7 : vector<8xf32> to vector<8x1xf32>
    %9 = vector.broadcast %8 : vector<8x1xf32> to vector<8x16xf32>
    %10 = arith.subf %0, %9 : vector<8x16xf32>
    %11 = math.exp %10 : vector<8x16xf32>
    %cst_7 = arith.constant dense<0.000000e+00> : vector<8xf32>
    %12 = vector.multi_reduction <add>, %11, %cst_7 [1] : vector<8x16xf32> to vector<8xf32>
    %13 = vector.shape_cast %12 : vector<8xf32> to vector<8x1xf32>
    %14 = vector.broadcast %13 : vector<8x1xf32> to vector<8x16xf32>
    %15 = arith.divf %11, %14 : vector<8x16xf32>
    %cst_8 = arith.constant 0.000000e+00 : f32
    %16 = vector.broadcast %cst_8 : f32 to vector<8x16xf32>
    %17 = arith.select %6, %0, %16 : vector<8x16xi1>, vector<8x16xf32>
    %cst_9 = arith.constant dense<0.000000e+00> : vector<8xf32>
    %18 = vector.multi_reduction <add>, %17, %cst_9 [1] : vector<8x16xf32> to vector<8xf32>
    %19 = vector.shape_cast %18 : vector<8xf32> to vector<8x1xf32>
    %cst_10 = arith.constant 0.000000e+00 : f32
    %20 = vector.shape_cast %2 : vector<1x16xf32> to vector<1x16xf32>
    %21 = vector.broadcast %20 : vector<1x16xf32> to vector<8x16xf32>
    %22 = vector.broadcast %cst_10 : f32 to vector<8x16xf32>
    %23 = arith.select %6, %21, %22 : vector<8x16xi1>, vector<8x16xf32>
    %cst_11 = arith.constant dense<0.000000e+00> : vector<8xf32>
    %24 = vector.multi_reduction <add>, %23, %cst_11 [1] : vector<8x16xf32> to vector<8xf32>
    %25 = vector.shape_cast %24 : vector<8xf32> to vector<8x1xf32>
    %26 = vector.broadcast %25 : vector<8x1xf32> to vector<8x16xf32>
    %27 = vector.broadcast %3 : vector<1x16xf32> to vector<8x16xf32>
    %28 = arith.mulf %26, %27 : vector<8x16xf32>
    %cst_12 = arith.constant 1.000000e+00 : f32
    %29 = vector.broadcast %cst_12 : f32 to vector<8x16xf32>
    %30 = arith.minimumf %28, %29 : vector<8x16xf32>
    %31 = arith.mulf %15, %15 : vector<8x16xf32>
    %32 = vector.broadcast %19 : vector<8x1xf32> to vector<8x16xf32>
    %33 = arith.cmpf ogt, %0, %32 : vector<8x16xf32>
    %cst_13 = arith.constant 1.000000e+00 : f32
    %34 = vector.broadcast %cst_13 : f32 to vector<8x16xf32>
    %35 = arith.select %33, %31, %34 : vector<8x16xi1>, vector<8x16xf32>
    %36 = arith.mulf %30, %35 : vector<8x16xf32>
    %cst_14 = arith.constant 1.000000e+00 : f32
    %37 = vector.broadcast %cst_14 : f32 to vector<8x16xf32>
    %38 = arith.select %6, %37, %36 : vector<8x16xi1>, vector<8x16xf32>
    %cst_15 = arith.constant 9.99999996E-13 : f32
    %39 = vector.broadcast %cst_15 : f32 to vector<8x16xf32>
    %40 = arith.addf %38, %39 : vector<8x16xf32>
    %41 = math.log %40 : vector<8x16xf32>
    %42 = arith.subf %0, %41 : vector<8x16xf32>
    %cst_16 = arith.constant dense<0xFF800000> : vector<8xf32>
    %43 = vector.multi_reduction <maximumf>, %42, %cst_16 [1] : vector<8x16xf32> to vector<8xf32>
    %44 = vector.shape_cast %43 : vector<8xf32> to vector<8x1xf32>
    %45 = vector.broadcast %44 : vector<8x1xf32> to vector<8x16xf32>
    %46 = arith.subf %42, %45 : vector<8x16xf32>
    %47 = math.exp %46 : vector<8x16xf32>
    %cst_17 = arith.constant dense<0.000000e+00> : vector<8xf32>
    %48 = vector.multi_reduction <add>, %47, %cst_17 [1] : vector<8x16xf32> to vector<8xf32>
    %49 = vector.shape_cast %48 : vector<8xf32> to vector<8x1xf32>
    %50 = math.log %49 : vector<8x1xf32>
    %cst_18 = arith.constant 0.000000e+00 : f32
    %51 = vector.broadcast %cst_18 : f32 to vector<8x16xf32>
    %52 = arith.select %6, %46, %51 : vector<8x16xi1>, vector<8x16xf32>
    %cst_19 = arith.constant dense<0.000000e+00> : vector<8xf32>
    %53 = vector.multi_reduction <add>, %52, %cst_19 [1] : vector<8x16xf32> to vector<8xf32>
    %54 = vector.shape_cast %53 : vector<8xf32> to vector<8x1xf32>
    %55 = arith.subf %54, %50 : vector<8x1xf32>
    %cst_20 = arith.constant 0.000000e+00 : f32
    %56 = vector.broadcast %cst_20 : f32 to vector<8x1xf32>
    %57 = arith.subf %56, %55 : vector<8x1xf32>
    %58 = tpu.iota {dimensions = array<i32: 0>} : vector<8x1xi32>
    %c8_i32 = arith.constant 8 : i32
    %59 = arith.muli %arg0, %c8_i32 : i32
    %60 = vector.broadcast %59 : i32 to vector<8x1xi32>
    %61 = arith.addi %58, %60 : vector<8x1xi32>
    %c8_i32_21 = arith.constant 8 : i32
    %62 = vector.broadcast %c8_i32_21 : i32 to vector<8x1xi32>
    %63 = arith.cmpi slt, %61, %62 : vector<8x1xi32>
    %cst_22 = arith.constant 0.000000e+00 : f32
    %64 = vector.broadcast %cst_22 : f32 to vector<8x1xf32>
    %65 = arith.select %63, %57, %64 : vector<8x1xi1>, vector<8x1xf32>
    %c0_23 = arith.constant 0 : index
    %c0_24 = arith.constant 0 : index
    %66 = vector.load %arg5[%c0_23, %c0_24] : memref<8x1xf32, #tpu.memory_space<vmem>>, vector<8x1xf32>
    tpu.vector_store %arg5[%c0_23, %c0_24], %65 {strides = array<i32>} : memref<8x1xf32, #tpu.memory_space<vmem>>, vector<8x1xf32>,
    return
  }
  func.func @transform_0(%arg0: i32) -> (i32, i32) {
    %c0_i32 = arith.constant 0 : i32
    %c0_i32_0 = arith.constant 0 : i32
    return %arg0, %c0_i32 : i32, i32
  }
  func.func @transform_1(%arg0: i32) -> (i32, i32) {
    %c0_i32 = arith.constant 0 : i32
    %c0_i32_0 = arith.constant 0 : i32
    return %arg0, %c0_i32 : i32, i32
  }
  func.func @transform_2(%arg0: i32) -> (i32, i32) {
    %c0_i32 = arith.constant 0 : i32
    %c0_i32_0 = arith.constant 0 : i32
    %c0_i32_1 = arith.constant 0 : i32
    return %c0_i32, %c0_i32_0 : i32, i32
  }
  func.func @transform_3(%arg0: i32) -> (i32, i32) {
    %c0_i32 = arith.constant 0 : i32
    %c0_i32_0 = arith.constant 0 : i32
    %c0_i32_1 = arith.constant 0 : i32
    return %c0_i32, %c0_i32_0 : i32, i32
  }
  func.func @transform_4(%arg0: i32) -> (i32, i32) {
    %c0_i32 = arith.constant 0 : i32
    %c0_i32_0 = arith.constant 0 : i32
    return %arg0, %c0_i32 : i32, i32
  }
}

</mosaic_0001>

<llo_original>
// kernel: tpu_custom_call.1
$region0: #{tpu_custom_call.1}
  #allocation0 [shape = 'u32[]', space=smem, size = 0x4, offset = 0x4, fixed_abs, tag = 'smem constant byte address 0x4 - core index']
  #allocation1 [shape = 'u32[144,128]{1,0:T(1,128)}', space=vmem, size = 0x12000, scoped, tag = 'internal scratch']
  %s0 = inlined_call_operand.vmem [shape: f32[8,16], index: 0, kind: input, shape index: {}]
  %s1 = inlined_call_operand.vmem [shape: s32[8,1], index: 1, kind: input, shape index: {}]
  %s2 = inlined_call_operand.vmem [shape: f32[1,16], index: 2, kind: input, shape index: {}]
  %s3 = inlined_call_operand.vmem [shape: f32[1,16], index: 3, kind: input, shape index: {}]
  %s4 = inlined_call_operand.vmem [shape: f32[8,1], index: 4, kind: output, shape index: {}]
  %s5 = sld [smem:[#allocation0]]
  $region26: #{tpu_custom_call.1} parent=0
    _
  %s7 = ssub.s32 1, %s5
  %s8 = scalar_select 0, %s7, %s5
  // Predicated region
  $region2: #{tpu_custom_call.1} parent=0 // pred_check
    _
  $region3: #{tpu_custom_call.1} parent=0 // pred_check_branch
    %10 = sbr.rel (0) target = $region5
  $region4: #{tpu_custom_call.1} parent=0 // pred_region
    _
  $region5: #{tpu_custom_call.1} parent=0 // pred_fallthru
    _
  // Predicated region
  $region6: #{tpu_custom_call.1} parent=0 // pred_check
    _
  $region7: #{tpu_custom_call.1} parent=0 // pred_check_branch
    %12 = sbr.rel (0) target = $region9
  $region8: #{tpu_custom_call.1} parent=0 // pred_region
    _
  $region9: #{tpu_custom_call.1} parent=0 // pred_fallthru
    _
  // Predicated region
  $region10: #{tpu_custom_call.1} parent=0 // pred_check
    _
  $region11: #{tpu_custom_call.1} parent=0 // pred_check_branch
    %14 = sbr.rel (0) target = $region13
  $region12: #{tpu_custom_call.1} parent=0 // pred_region
    _
  $region13: #{tpu_custom_call.1} parent=0 // pred_fallthru
    _
  // Predicated region
  $region14: #{tpu_custom_call.1} parent=0 // pred_check
    _
  $region15: #{tpu_custom_call.1} parent=0 // pred_check_branch
    %16 = sbr.rel (0) target = $region17
  $region16: #{tpu_custom_call.1} parent=0 // pred_region
    _
  $region17: #{tpu_custom_call.1} parent=0 // pred_fallthru
    _
  %v17 = vld [vmem:[%s0] sm:$0xff]
  %v18 = vld [vmem:[%s1] sm:$0xff]
  %v19 = vld [vmem:[%s2] sm:$0x1]
  %v20 = vld [vmem:[%s3] sm:$0x1]
  %v21 = vlaneseq
  %v22 = vand.u32 %v21, 127
  %23 = vset.pattern.permute.xlu0 0
  %24 = vperm.xlu0 %23, %v18
  %v25 = vpop.permute.xlu0 %24
  %vm26 = vcmp.eq.s32.totalorder %v22, %v25
  %vm27 = vcmask 130048
  %v28 = vsel %vm27, %v17, -inf
  %29 = vmax.xlane.f32.xlu0 %v28
  %v30 = vpop.xlane.xlu0 %29
  %v31 = vsub.f32 %v17, %v30
  %v32 = vmul.f32 %v31, 1.442695
  %v33 = vpow.pop %v32
  %v34 = vsel %vm27, %v33, 0.0
  %35 = vadd.xlane.f32.xlu0 %v34
  %v36 = vpop.xlane.xlu0 %35
  %v37 = vrcp.pop %v36
  %v38 = vmul.f32 %v33, %v37
  %v39 = vsel %vm26, %v17, 0.0
  %v40 = vsel %vm27, %v39, 0.0
  %41 = vadd.xlane.f32.xlu0 %v40
  %v42 = vpop.xlane.xlu0 %41
  %v44 = vlaneseq
  %v45 = vshrl.u32 %v44, 7
  %v46 = vsub.s32 0, %v45
  %v47 = vrot.slane %v19, %v46
  %v49 = vsel %vm26, %v47, 0.0
  %v50 = vsel %vm27, %v49, 0.0
  %51 = vadd.xlane.f32.xlu0 %v50
  %v52 = vpop.xlane.xlu0 %51
  %v54 = vlaneseq
  %v55 = vshrl.u32 %v54, 7
  %v56 = vsub.s32 0, %v55
  %v57 = vrot.slane %v20, %v56
  %v59 = vmul.f32 %v52, %v57
  %v60 = vmin.f32 %v59, 1.0
  %v61 = vmul.f32 %v38, %v38
  %vm62 = vcmp.gt.f32.partialorder %v17, %v42
  %v63 = vsel %vm62, %v61, 1.0
  %v64 = vmul.f32 %v60, %v63
  %v65 = vsel %vm26, 1.0, %v64
  %v66 = vadd.f32 %v65, 1e-12
  %v67 = vlog2.pop %v66
  %v68 = vmul.f32 %v67, 0.6931472
  %v69 = vsub.f32 %v17, %v68
  %v70 = vsel %vm27, %v69, -inf
  %71 = vmax.xlane.f32.xlu0 %v70
  %v72 = vpop.xlane.xlu0 %71
  %v73 = vsub.f32 %v69, %v72
  %v74 = vmul.f32 %v73, 1.442695
  %v75 = vpow.pop %v74
  %v76 = vsel %vm27, %v75, 0.0
  %77 = vadd.xlane.f32.xlu0 %v76
  %v78 = vpop.xlane.xlu0 %77
  %v79 = vlog2.pop %v78
  %v80 = vmul.f32 %v79, 0.6931472
  %v81 = vsel %vm26, %v73, 0.0
  %v82 = vsel %vm27, %v81, 0.0
  %83 = vadd.xlane.f32.xlu0 %v82
  %v84 = vpop.xlane.xlu0 %83
  %v85 = vsub.f32 %v84, %v80
  %v86 = vsub.f32 0.0, %v85
  %v87 = vlaneseq
  %v88 = vshrl.u32 %v87, 7
  %s89 = smul.u32 0, 8
  %v90 = vstv %s89
  %v91 = vadd.s32 %v88, %v90
  %vm92 = vcmp.lt.s32.totalorder %v91, 8
  %v93 = vsel %vm92, %v86, 0.0
  %vm94 = vcmask 7168
  %95 = vst.msk [vmem:[%s4] sm:$0xff] %vm94, %v93
  // Predicated region
  $region18: #{tpu_custom_call.1} parent=0 // pred_check
    _
  $region19: #{tpu_custom_call.1} parent=0 // pred_check_branch
    %97 = sbr.rel (0) target = $region21
  $region20: #{tpu_custom_call.1} parent=0 // pred_region
    _
  $region21: #{tpu_custom_call.1} parent=0 // pred_fallthru
    _
  // Predicated region
  $region22: #{tpu_custom_call.1} parent=0 // pred_check
    _
  $region23: #{tpu_custom_call.1} parent=0 // pred_check_branch
    %99 = sbr.rel (0) target = $region25
  $region24: #{tpu_custom_call.1} parent=0 // pred_region
    _
  $region25: #{tpu_custom_call.1} parent=0 // pred_fallthru
    _

</llo_original>
